<compile_context>
chip_gen: v6e
topology: v6e:2x2x1
jax: 0.10.0
libtpu: 0.0.40
codegen_flags: <defaults>
</compile_context>

<pallas_src>
import jax
import jax.numpy as jnp
from jax import lax
from jax.experimental import pallas as pl
from jax.experimental.pallas import tpu as pltpu

EPS = 1e-5
LANE = 128
TARGET_TILE_BYTES = 8 * 1024 * 1024      # target size for one x block
VMEM_BUDGET_BYTES = 40 * 1024 * 1024     # sizing budget (headroom under the limit)
VMEM_LIMIT_BYTES = 48 * 1024 * 1024      # explicit scoped-VMEM limit (<= 64 MiB v7x)
_SUBLANE = {4: 8, 2: 16, 1: 32}          # dtype-native sublane packing tile


def _round_up(v, m):
    return -(-v // m) * m


def frozen_bn_kernel(scale_ref, shift_ref, x_ref, o_ref):
    # scale/shift: (br, 1) or (1, bl) float32, broadcast against x (br, bl).
    x = x_ref[...].astype(jnp.float32)
    o_ref[...] = (x * scale_ref[...] + shift_ref[...]).astype(o_ref.dtype)


def frozen_batch_norm_2d(x, weight, bias, running_mean, running_var, *, donate_x=False):
    """x: (N, C, H, W); params: (C,). Matches PyTorch FrozenBatchNorm2d.forward."""
    N, C, H, W = x.shape
    HW = H * W
    isz = jnp.dtype(x.dtype).itemsize
    sl = _SUBLANE.get(isz, 8)

    # Fold frozen stats into a per-channel affine, kept in float32.
    inv = lax.rsqrt(running_var.astype(jnp.float32) + EPS)
    scale = weight.astype(jnp.float32) * inv                              # (C,)
    shift = bias.astype(jnp.float32) - running_mean.astype(jnp.float32) * scale

    if HW % LANE == 0:
        # ---- Lane-dense plane: view as (N*C, H*W), per-row affine. ----
        R, L = N * C, HW
        x2 = x.reshape(R, L)
        s2 = jnp.tile(scale, N).reshape(R, 1)
        b2 = jnp.tile(shift, N).reshape(R, 1)

        # Lane block: full rows if an sl-row slab fits the target, else split L
        # into large multiples of 128 (second grid axis) sized for an sl-row slab.
        if L * isz * sl <= TARGET_TILE_BYTES:
            bl = L
        else:
            bl = min(L, max(LANE, (TARGET_TILE_BYTES // (sl * isz * LANE)) * LANE))
        padbl = _round_up(bl, LANE)

        # Row block: fill the target, then clamp to the per-step VMEM budget
        #   per-step bytes ~= br * (4*padbl*isz  +  4*128*4)   (dbl-buffered in/out + f32 affine)
        br = max(1, TARGET_TILE_BYTES // (padbl * isz))
        br = min(br, max(1, VMEM_BUDGET_BYTES // (4 * padbl * isz + 4 * LANE * 4)))
        # Let v7x's two TensorCores see >= 2 grid steps when the lane axis is trivial.
        if pl.cdiv(L, bl) == 1 and R >= 2 * sl:
            br = min(br, pl.cdiv(R, 2))
        br = R if br >= R else max(sl, (br // sl) * sl)

        grid = (pl.cdiv(R, br), pl.cdiv(L, bl))
        data_spec = pl.BlockSpec((br, bl), lambda i, j: (i, j))
        aff_spec = pl.BlockSpec((br, 1), lambda i, j: (i, 0))
    else:
        # ---- Ragged H*W (e.g. 7x7/14x14/56x56): view as (N, C*H*W), per-lane affine. ----
        R, L = N, C * HW
        x2 = x.reshape(R, L)
        s2 = jnp.repeat(scale, HW).reshape(1, L)
        b2 = jnp.repeat(shift, HW).reshape(1, L)

        # Prefer ~32 rows per step (amortizes re-reading the per-lane affine slab).
        rows_pref = max(1, min(R, max(sl, 32)))
        bl = min(L, max(LANE, (TARGET_TILE_BYTES // (rows_pref * isz * LANE)) * LANE))
        # Keep (x in/out + padded (8, bl) f32 affine) under the VMEM budget at rows_pref rows:
        #   per-step bytes ~= padbl * (4*rows_pref*isz + 128)
        bl_cap = max(LANE, (VMEM_BUDGET_BYTES // ((4 * rows_pref * isz + 128) * LANE)) * LANE)
        bl = min(bl, bl_cap)
        if bl >= L:
            bl = L
        padbl = _round_up(bl, LANE)

        br = max(1, (VMEM_BUDGET_BYTES - 128 * padbl) // (4 * padbl * isz))
        br = min(br, max(1, TARGET_TILE_BYTES // (padbl * isz)))
        if pl.cdiv(L, bl) == 1 and R >= 2 * sl:
            br = min(br, pl.cdiv(R, 2))
        br = R if br >= R else max(sl, (br // sl) * sl)

        grid = (pl.cdiv(R, br), pl.cdiv(L, bl))
        data_spec = pl.BlockSpec((br, bl), lambda i, j: (i, j))
        aff_spec = pl.BlockSpec((1, bl), lambda i, j: (0, j))

    out2 = pl.pallas_call(
        frozen_bn_kernel,
        out_shape=jax.ShapeDtypeStruct((R, L), x.dtype),
        grid=grid,
        in_specs=[aff_spec, aff_spec, data_spec],
        out_specs=data_spec,
        input_output_aliases=({2: 0} if donate_x else {}),
        compiler_params=pltpu.CompilerParams(
            dimension_semantics=("parallel", "parallel"),
            vmem_limit_bytes=VMEM_LIMIT_BYTES),
    )(s2, b2, x2)

    return out2.reshape(N, C, H, W)


def frozen_batch_norm_2d_ref(x, weight, bias, running_mean, running_var):
    w = weight.reshape(1, -1, 1, 1)
    b = bias.reshape(1, -1, 1, 1)
    rv = running_var.reshape(1, -1, 1, 1)
    rm = running_mean.reshape(1, -1, 1, 1)
    scale = w * lax.rsqrt(rv + EPS)
    return x * scale + (b - rm * scale)


if __name__ == "__main__":
    key = jax.random.PRNGKey(0)
    kx, kw, kb, km, kv, kx2 = jax.random.split(key, 6)

    # Lane-dense path: H*W = 256 (multiple of 128).
    N, C, H, W = 2, 4, 16, 16
    x = jax.random.normal(kx, (N, C, H, W), dtype=jnp.float32)
    weight = 1.0 + 0.1 * jax.random.normal(kw, (C,), dtype=jnp.float32)
    bias = 0.1 * jax.random.normal(kb, (C,), dtype=jnp.float32)
    running_mean = 0.5 * jax.random.normal(km, (C,), dtype=jnp.float32)
    running_var = jax.random.uniform(kv, (C,), dtype=jnp.float32, minval=0.5, maxval=1.5)

    out = jax.block_until_ready(frozen_batch_norm_2d(x, weight, bias, running_mean, running_var))
    ref = frozen_batch_norm_2d_ref(x, weight, bias, running_mean, running_var)
    assert out.shape == x.shape and out.dtype == x.dtype
    assert jnp.allclose(out, ref, atol=1e-5, rtol=1e-5), "lane-dense mismatch vs reference"

    # Ragged path: H*W = 49 (not a multiple of 128) -> (N, C*H*W) per-lane affine view.
    x_r = jax.random.normal(kx2, (N, C, 7, 7), dtype=jnp.float32)
    out_r = jax.block_until_ready(frozen_batch_norm_2d(x_r, weight, bias, running_mean, running_var))
    ref_r = frozen_batch_norm_2d_ref(x_r, weight, bias, running_mean, running_var)
    assert out_r.shape == x_r.shape and out_r.dtype == x_r.dtype
    assert jnp.allclose(out_r, ref_r, atol=1e-5, rtol=1e-5), "ragged mismatch vs reference"

    print("KERNEL_OK")
</pallas_src>

<mosaic_0001>
module attributes {stable_mosaic.version = 11 : i64} {
  func.func @frozen_bn_kernel(%arg0: i32, %arg1: i32, %arg2: memref<8x1xf32, #tpu.memory_space<vmem>>, %arg3: memref<8x1xf32, #tpu.memory_space<vmem>>, %arg4: memref<8x256xf32, #tpu.memory_space<vmem>>, %arg5: memref<8x256xf32, #tpu.memory_space<vmem>>) attributes {dimension_semantics = [#tpu.dimension_semantics<parallel>, #tpu.dimension_semantics<parallel>], iteration_bounds = array<i64: 1, 1>, scalar_prefetch = 0 : i64, scratch_operands = 0 : i64, tpu.core_type = #tpu.core_type<tc>, window_params = [{transform_indices = @transform_0, window_bounds = array<i64: 8, 1>}, {transform_indices = @transform_1, window_bounds = array<i64: 8, 1>}, {transform_indices = @transform_2, window_bounds = array<i64: 8, 256>}, {transform_indices = @transform_3, window_bounds = array<i64: 8, 256>}]} {
    %c0 = arith.constant 0 : index
    %c0_0 = arith.constant 0 : index
    %0 = vector.load %arg4[%c0, %c0_0] : memref<8x256xf32, #tpu.memory_space<vmem>>, vector<8x256xf32>
    %c0_1 = arith.constant 0 : index
    %c0_2 = arith.constant 0 : index
    %1 = vector.load %arg2[%c0_1, %c0_2] : memref<8x1xf32, #tpu.memory_space<vmem>>, vector<8x1xf32>
    %2 = vector.broadcast %1 : vector<8x1xf32> to vector<8x256xf32>
    %3 = arith.mulf %0, %2 : vector<8x256xf32>
    %c0_3 = arith.constant 0 : index
    %c0_4 = arith.constant 0 : index
    %4 = vector.load %arg3[%c0_3, %c0_4] : memref<8x1xf32, #tpu.memory_space<vmem>>, vector<8x1xf32>
    %5 = vector.broadcast %4 : vector<8x1xf32> to vector<8x256xf32>
    %6 = arith.addf %3, %5 : vector<8x256xf32>
    %c0_5 = arith.constant 0 : index
    %c0_6 = arith.constant 0 : index
    %7 = vector.load %arg5[%c0_5, %c0_6] : memref<8x256xf32, #tpu.memory_space<vmem>>, vector<8x256xf32>
    tpu.vector_store %arg5[%c0_5, %c0_6], %6 {strides = array<i32>} : memref<8x256xf32, #tpu.memory_space<vmem>>, vector<8x256xf32>,
    return
  }
  func.func @transform_0(%arg0: i32, %arg1: i32) -> (i32, i32) {
    %c0_i32 = arith.constant 0 : i32
    %c0_i32_0 = arith.constant 0 : i32
    return %arg0, %c0_i32 : i32, i32
  }
  func.func @transform_1(%arg0: i32, %arg1: i32) -> (i32, i32) {
    %c0_i32 = arith.constant 0 : i32
    %c0_i32_0 = arith.constant 0 : i32
    return %arg0, %c0_i32 : i32, i32
  }
  func.func @transform_2(%arg0: i32, %arg1: i32) -> (i32, i32) {
    %c0_i32 = arith.constant 0 : i32
    return %arg0, %arg1 : i32, i32
  }
  func.func @transform_3(%arg0: i32, %arg1: i32) -> (i32, i32) {
    %c0_i32 = arith.constant 0 : i32
    return %arg0, %arg1 : i32, i32
  }
}

</mosaic_0001>

<llo_original>
// kernel: tpu_custom_call.1
$region0: #{tpu_custom_call.1}
  #allocation0 [shape = 'u32[]', space=smem, size = 0x4, offset = 0x4, fixed_abs, tag = 'smem constant byte address 0x4 - core index']
  #allocation1 [shape = 'u32[144,128]{1,0:T(1,128)}', space=vmem, size = 0x12000, scoped, tag = 'internal scratch']
  %s0 = inlined_call_operand.vmem [shape: f32[8,1], index: 0, kind: input, shape index: {}]
  %s1 = inlined_call_operand.vmem [shape: f32[8,1], index: 1, kind: input, shape index: {}]
  %s2 = inlined_call_operand.vmem [shape: f32[8,256], index: 2, kind: input, shape index: {}]
  %s3 = inlined_call_operand.hbm [shape: f32[8,256], index: 3, kind: output, shape index: {}]
  %s4 = sld [smem:[#allocation0]]
  $region22: #{tpu_custom_call.1} parent=0
    _
  %s6 = ssub.s32 1, %s4
  %s7 = scalar_select 0, %s6, %s4
  $region1: #{tpu_custom_call.1} parent=0
    #allocation2 [shape = 'u8[8192]{0}', space=vmem, size = 0x2000, scoped, tag = 'output window, operand 0, single buffered']
    #allocation3 [shape = 's32[1]{0}', space=sflag, size = 0x4, scoped, tag = 'scoped memory for tpu_custom_call.1']
    %8 = vsyncpa [#allocation3], 0
    // Predicated region
    $region2: #{tpu_custom_call.1} parent=1 // pred_check
      _
    $region3: #{tpu_custom_call.1} parent=1 // pred_check_branch
      %10 = sbr.rel (0) target = $region5
    $region4: #{tpu_custom_call.1} parent=1 // pred_region
      _
    $region5: #{tpu_custom_call.1} parent=1 // pred_fallthru
      _
    // Predicated region
    $region6: #{tpu_custom_call.1} parent=1 // pred_check
      _
    $region7: #{tpu_custom_call.1} parent=1 // pred_check_branch
      %12 = sbr.rel (0) target = $region9
    $region8: #{tpu_custom_call.1} parent=1 // pred_region
      _
    $region9: #{tpu_custom_call.1} parent=1 // pred_fallthru
      _
    // Predicated region
    $region10: #{tpu_custom_call.1} parent=1 // pred_check
      _
    $region11: #{tpu_custom_call.1} parent=1 // pred_check_branch
      %14 = sbr.rel (0) target = $region13
    $region12: #{tpu_custom_call.1} parent=1 // pred_region
      _
    $region13: #{tpu_custom_call.1} parent=1 // pred_fallthru
      _
    %v15 = vld [vmem:[%s2] sm:$0xff]
    %v16 = vld [vmem:[%s2 + $0x8] sm:$0xff]
    %v17 = vld [vmem:[%s0] sm:$0xff]
    %19 = vset.pattern.permute.xlu0 0
    %20 = vperm.xlu0 %19, %v17
    %v21 = vpop.permute.xlu0 %20
    %v23 = vmul.f32 %v15, %v21
    %v24 = vmul.f32 %v16, %v21
    %v25 = vld [vmem:[%s1] sm:$0xff]
    %27 = vset.pattern.permute.xlu0 0
    %28 = vperm.xlu0 %27, %v25
    %v29 = vpop.permute.xlu0 %28
    %v31 = vadd.f32 %v23, %v29
    %v32 = vadd.f32 %v24, %v29
    %33 = vst [vmem:[#allocation2] sm:$0xff] %v31
    %34 = vst [vmem:[#allocation2 + $0x8] sm:$0xff] %v32
    // Predicated region
    $region14: #{tpu_custom_call.1} parent=1 // pred_check
      _
    $region15: #{tpu_custom_call.1} parent=1 // pred_check_branch
      %36 = sbr.rel (0) target = $region17
    $region16: #{tpu_custom_call.1} parent=1 // pred_region
      %s38 = ssub.s32 256, 256
      %39 = vsyncadd [#allocation3], %s38
      %s41 = sshll.u32 [#allocation2], 4
      %s42 = int_to_ptr.vmem [resolvable:$true] %s41
      %44 = dma.vmem_to_hbm [thread:$0]  %s42, 256, %s3, [#allocation3]
    $region17: #{tpu_custom_call.1} parent=1 // pred_fallthru
      _
    // Predicated region
    $region18: #{tpu_custom_call.1} parent=1 // pred_check
      _
    $region19: #{tpu_custom_call.1} parent=1 // pred_check_branch
      %46 = sbr.rel (0) target = $region21
    $region20: #{tpu_custom_call.1} parent=1 // pred_region
      %47 = dma.done [#allocation3], 256
    $region21: #{tpu_custom_call.1} parent=1 // pred_fallthru
      _
    %48 = vsyncpa [#allocation3], 1

</llo_original>
